<compile_context>
chip_gen: v7x
topology: tpu7x:2x2x1
jax: 0.10.0
libtpu: 0.0.40
codegen_flags: <defaults>
</compile_context>

<pallas_src>
import jax
import jax.numpy as jnp
from jax.experimental import pallas as pl
from jax.experimental.pallas import tpu as pltpu

_LANE = 128
_MAX_LANES = 1024  # widest lane-dense last dim we try (multiple of 128)


def _copy_kernel(x_ref, o_ref):
    # Pure pass-through: forward() in the reference module has no body.
    o_ref[...] = x_ref[...]


def _sublane_multiple(dtype) -> int:
    # f32 -> 8, bf16 -> 16, int8/fp8 -> 32 (sub-32-bit dtypes pack sublanes).
    itemsize = jnp.dtype(dtype).itemsize
    return max(8, 32 // max(1, itemsize))


def _target_block_bytes() -> int:
    """~4 MiB blocks on 128 MiB-VMEM chips (v5e/v6e), ~2 MiB elsewhere (v7x).

    4 buffers (in + out, double-buffered) x 4 MiB = 16 MiB, comfortably under
    the 32 MiB scoped default on v5e/v6e; the 2 MiB choice keeps v7x (64 MiB
    physical VMEM) at ~8 MiB residency.
    """
    try:
        vmem = pltpu.get_tpu_info().vmem_capacity_bytes
    except Exception:
        return 2 << 20  # conservative default if the query is unavailable
    return (4 << 20) if vmem >= (100 << 20) else (2 << 20)


def _choose_width(total: int) -> int:
    """Largest multiple of 128 that divides `total`, capped at _MAX_LANES."""
    for cand in range(_MAX_LANES, _LANE - 1, -_LANE):
        if total % cand == 0:
            return cand
    return _LANE


def _choose_block_rows(rows: int, width: int, dtype) -> int:
    """Block row count targeting ~2-4 MiB lane-dense blocks.

    Returns either a multiple of the dtype's sublane packing (legal with a
    partial trailing block via a cdiv grid) or the full row extent (block dims
    == array dims is always legal) -- never a whole-array block for large
    inputs.
    """
    sub = _sublane_multiple(dtype)
    itemsize = jnp.dtype(dtype).itemsize
    target_rows = max(sub, _target_block_bytes() // (width * itemsize))
    block_rows = max(sub, (target_rows // sub) * sub)
    return min(block_rows, rows)


def _pallas_identity_copy_2d(x2d):
    rows, width = x2d.shape
    block_rows = _choose_block_rows(rows, width, x2d.dtype)
    grid = (pl.cdiv(rows, block_rows),)
    nbytes = rows * width * jnp.dtype(x2d.dtype).itemsize
    return pl.pallas_call(
        _copy_kernel,
        out_shape=jax.ShapeDtypeStruct((rows, width), x2d.dtype),
        grid=grid,
        in_specs=[pl.BlockSpec((block_rows, width), lambda i: (i, 0))],
        out_specs=pl.BlockSpec((block_rows, width), lambda i: (i, 0)),
        # Reuse the input HBM buffer for the output when the caller donates it
        # (jit(..., donate_argnums=...)); otherwise XLA inserts a safe copy.
        input_output_aliases={0: 0},
        compiler_params=pltpu.CompilerParams(
            dimension_semantics=("parallel",),
        ),
        cost_estimate=pl.CostEstimate(
            flops=0, transcendentals=0, bytes_accessed=2 * nbytes
        ),
    )(x2d)


def net_forward(x):
    """Pallas translation of Net.forward.

    The reference forward() body is `pass` (returns None): there is no compute
    to reproduce, so the semantically optimal implementation is simply
    `return x` (zero HBM traffic).  We keep a lane-dense identity-copy
    pallas_call so the TPU data path is actually exercised.
    """
    total = x.size
    if total == 0:
        return x

    flat = x.reshape(-1)
    pad = (-total) % _LANE
    if pad:
        # Unaligned sizes: pad outside the kernel, copy tiled, slice back.
        flat = jnp.pad(flat, (0, pad))
    padded_total = total + pad

    width = _choose_width(padded_total)
    rows = padded_total // width

    out2d = _pallas_identity_copy_2d(flat.reshape(rows, width))

    out_flat = out2d.reshape(-1)
    if pad:
        out_flat = out_flat[:total]
    return out_flat.reshape(x.shape)


if __name__ == "__main__":
    key = jax.random.PRNGKey(0)
    x = jax.random.normal(key, (2, 4, 16, 16), dtype=jnp.float32)

    out = net_forward(x)
    jax.block_until_ready(out)
    assert out.shape == x.shape and out.dtype == x.dtype
    assert bool(jnp.allclose(out, x)), "identity kernel mismatch"

    # Also exercise the unaligned (size % 128 != 0) padded path once.
    y = jax.random.normal(jax.random.PRNGKey(0), (3, 5, 7), dtype=jnp.float32)
    out_y = net_forward(y)
    jax.block_until_ready(out_y)
    assert out_y.shape == y.shape and out_y.dtype == y.dtype
    assert bool(jnp.allclose(out_y, y)), "identity kernel mismatch (unaligned)"

    print("KERNEL_OK")
</pallas_src>

<mosaic_0001>
module attributes {stable_mosaic.version = 11 : i64} {
  func.func @_copy_kernel(%arg0: i32, %arg1: memref<2x1024xf32, #tpu.memory_space<vmem>>, %arg2: memref<2x1024xf32, #tpu.memory_space<vmem>>) attributes {dimension_semantics = [#tpu.dimension_semantics<parallel>], iteration_bounds = array<i64: 1>, scalar_prefetch = 0 : i64, scratch_operands = 0 : i64, tpu.core_type = #tpu.core_type<tc>, window_params = [{transform_indices = @transform_0, window_bounds = array<i64: 2, 1024>}, {transform_indices = @transform_1, window_bounds = array<i64: 2, 1024>}]} {
    %c0 = arith.constant 0 : index
    %c0_0 = arith.constant 0 : index
    %0 = vector.load %arg1[%c0, %c0_0] : memref<2x1024xf32, #tpu.memory_space<vmem>>, vector<2x1024xf32>
    %c0_1 = arith.constant 0 : index
    %c0_2 = arith.constant 0 : index
    %1 = vector.load %arg2[%c0_1, %c0_2] : memref<2x1024xf32, #tpu.memory_space<vmem>>, vector<2x1024xf32>
    tpu.vector_store %arg2[%c0_1, %c0_2], %0 {strides = array<i32>} : memref<2x1024xf32, #tpu.memory_space<vmem>>, vector<2x1024xf32>,
    return
  }
  func.func @transform_0(%arg0: i32) -> (i32, i32) {
    %c0_i32 = arith.constant 0 : i32
    %c0_i32_0 = arith.constant 0 : i32
    return %arg0, %c0_i32 : i32, i32
  }
  func.func @transform_1(%arg0: i32) -> (i32, i32) {
    %c0_i32 = arith.constant 0 : i32
    %c0_i32_0 = arith.constant 0 : i32
    return %arg0, %c0_i32 : i32, i32
  }
}

</mosaic_0001>

<llo_original>
// kernel: tpu_custom_call.1
$region0: #{tpu_custom_call.1}
  #allocation0 [shape = 'u32[]', space=smem, size = 0x4, offset = 0x4, fixed_abs, tag = 'smem constant byte address 0x4 - core index']
  #allocation1 [shape = 'u32[144,128]{1,0:T(1,128)}', space=vmem, size = 0x12000, scoped, tag = 'internal scratch']
  %s0 = inlined_call_operand.hbm [shape: f32[2,1024], index: 0, kind: input, shape index: {}, may-alias: {0,1}]
  %s1 = inlined_call_operand.hbm [shape: f32[2,1024], index: 1, kind: output, shape index: {}, may-alias: {0,1}]
  %s2 = sld [smem:[#allocation0]]
  $region18: #{tpu_custom_call.1} parent=0
    _
  %s4 = ssub.s32 1, %s2
  %s5 = scalar_select 0, %s4, %s2
  $region1: #{tpu_custom_call.1} parent=0
    #allocation2 [shape = 'u8[8192]{0}', space=vmem, size = 0x2000, scoped, tag = 'input window, operand 0, single buffered']
    #allocation3 [shape = 's32[1]{0}', space=sflag, size = 0x4, scoped, tag = 'scoped memory for tpu_custom_call.1']
    #allocation4 [shape = 's32[1]{0}', space=sflag, size = 0x4, scoped, tag = 'scoped memory for tpu_custom_call.1']
    #allocation5 [shape = 'u8[8192]{0}', space=vmem, size = 0x2000, scoped, tag = 'output window, operand 0, single buffered']
    %6 = vsyncpa [#allocation3], 0
    %7 = vsyncpa [#allocation4], 0
    // Predicated region
    $region2: #{tpu_custom_call.1} parent=1 // pred_check
      _
    $region3: #{tpu_custom_call.1} parent=1 // pred_check_branch
      %9 = sbr.rel (0) target = $region5
    $region4: #{tpu_custom_call.1} parent=1 // pred_region
      %s11 = ssub.s32 256, 256
      %12 = vsyncadd [#allocation3], %s11
      %s14 = sshll.u32 [#allocation2], 4
      %s15 = int_to_ptr.vmem [resolvable:$true] %s14
      %17 = dma.hbm_to_vmem [thread:$0]  %s0, 256, %s15, [#allocation3]
    $region5: #{tpu_custom_call.1} parent=1 // pred_fallthru
      _
    // Predicated region
    $region6: #{tpu_custom_call.1} parent=1 // pred_check
      _
    $region7: #{tpu_custom_call.1} parent=1 // pred_check_branch
      %19 = sbr.rel (0) target = $region9
    $region8: #{tpu_custom_call.1} parent=1 // pred_region
      %20 = dma.done [#allocation3], 256
    $region9: #{tpu_custom_call.1} parent=1 // pred_fallthru
      _
    %v21 = vld [vmem:[#allocation2] sm:$0xff]
    %v22 = vld [vmem:[#allocation2 + $0x8] sm:$0xff]
    %23 = vst [vmem:[#allocation5] sm:$0xff] %v21
    %24 = vst [vmem:[#allocation5 + $0x8] sm:$0xff] %v22
    // Predicated region
    $region10: #{tpu_custom_call.1} parent=1 // pred_check
      _
    $region11: #{tpu_custom_call.1} parent=1 // pred_check_branch
      %26 = sbr.rel (0) target = $region13
    $region12: #{tpu_custom_call.1} parent=1 // pred_region
      %s28 = ssub.s32 256, 256
      %29 = vsyncadd [#allocation4], %s28
      %s31 = sshll.u32 [#allocation5], 4
      %s32 = int_to_ptr.vmem [resolvable:$true] %s31
      %34 = dma.vmem_to_hbm [thread:$0]  %s32, 256, %s1, [#allocation4]
    $region13: #{tpu_custom_call.1} parent=1 // pred_fallthru
      _
    // Predicated region
    $region14: #{tpu_custom_call.1} parent=1 // pred_check
      _
    $region15: #{tpu_custom_call.1} parent=1 // pred_check_branch
      %36 = sbr.rel (0) target = $region17
    $region16: #{tpu_custom_call.1} parent=1 // pred_region
      %37 = dma.done [#allocation4], 256
    $region17: #{tpu_custom_call.1} parent=1 // pred_fallthru
      _
    %38 = vsyncpa [#allocation3], 1
    %39 = vsyncpa [#allocation4], 1

</llo_original>
